<compile_context>
chip_gen: v7x
topology: tpu7x:2x2x1
jax: 0.10.0
libtpu: 0.0.40
codegen_flags: <defaults>
</compile_context>

<pallas_src>
import jax
import jax.numpy as jnp
from jax import lax
from jax.experimental import pallas as pl
from jax.experimental.pallas import tpu as pltpu


def _round_up(x, m):
    return ((x + m - 1) // m) * m


def _ceil_div(a, b):
    return -(-a // b)


# ---------------------------------------------------------------------------
# Kernel: one fused encoder matmul + bias + ReLU, one folded regressor/fusion
# matmul producing a lane-dense (1, TILE_B) output block.
# ---------------------------------------------------------------------------
def _late_fusion_kernel(x_ref, we_ref, be_ref, wo_ref, out_ref):
    f32 = jnp.float32
    # Fused encoders: (TILE_B, D_pad) @ (D_pad, F_pad) + (1, F_pad), then ReLU.
    # Operands may be bf16; accumulation / epilogue are f32.
    feat = jnp.maximum(
        jnp.dot(x_ref[...], we_ref[...], preferred_element_type=f32)
        + be_ref[...],
        0.0,
    )
    # Folded regressors + fusion (+ bias via the constant-one feature column):
    # (1, F_pad) x (TILE_B, F_pad) contracting F_pad -> (1, TILE_B).
    # rhs-transposed contraction = MXU transposed feed; no XLU transpose of feat.
    out_ref[...] = lax.dot_general(
        wo_ref[...], feat,
        dimension_numbers=(((1,), (1,)), ((), ())),
        preferred_element_type=f32,
    )


# ---------------------------------------------------------------------------
# Parameter packing (trace-time; in real use pre-pack once per model).
# ---------------------------------------------------------------------------
def _pack_params(p, d_ppg, d_hr, d_th, hidden, d_pad, f_pad):
    H = hidden
    d_tot = d_ppg + d_hr + d_th

    # Block-diagonal fused encoder weight (input order: ppg | hr | thermal).
    # Rows [d_tot:d_pad] stay zero (feature padding), columns [3H+1:f_pad] too.
    W = jnp.zeros((d_pad, f_pad), jnp.float32)
    W = W.at[:d_ppg, 0:H].set(p["wpe"])
    W = W.at[d_ppg:d_ppg + d_hr, H:2 * H].set(p["whe"])
    W = W.at[d_ppg + d_hr:d_tot, 2 * H:3 * H].set(p["wte"])

    # Fused encoder bias; column 3H is the constant-one feature (its weight
    # column is zero, so relu(0 + 1) == 1 for every row).
    b = jnp.zeros((1, f_pad), jnp.float32)
    b = b.at[:, 0:H].set(p["bpe"])
    b = b.at[:, H:2 * H].set(p["bhe"])
    b = b.at[:, 2 * H:3 * H].set(p["bte"])
    b = b.at[:, 3 * H].set(1.0)

    # Regressor weights scaled by the fusion weights; folded bias on col 3H.
    wf = p["wf"]
    wo = jnp.zeros((1, f_pad), jnp.float32)
    wo = wo.at[:, 0:H].set((p["wpr"][:, 0] * wf[0])[None, :])
    wo = wo.at[:, H:2 * H].set((p["whr"][:, 0] * wf[1])[None, :])
    wo = wo.at[:, 2 * H:3 * H].set((p["wtr"][:, 0] * wf[2])[None, :])
    b_fold = (p["bpr"][0] * wf[0] + p["bhr"][0] * wf[1]
              + p["btr"][0] * wf[2] + p["bf"][0])
    wo = wo.at[:, 3 * H].set(b_fold)
    return W, b, wo


# ---------------------------------------------------------------------------
# Forward wrapper — matches LateFusionModel.forward(ppg_data, thermal_data,
# hr_data) and returns (B, 1).
# ---------------------------------------------------------------------------
def late_fusion_forward(ppg, thermal, hr, params, *, tile_b=1024,
                        operand_dtype=jnp.float32):
    B = ppg.shape[0]
    d_ppg, d_hr, d_th = ppg.shape[1], hr.shape[1], thermal.shape[1]
    H = params["wpe"].shape[1]
    D = d_ppg + d_hr + d_th

    f_pad = _round_up(3 * H + 1, 128)     # 3H features + 1 bias column, lane-pad
    d_pad = _round_up(D, 128)             # lane/K-aligned streamed input

    W_enc, b_enc, w_out = _pack_params(params, d_ppg, d_hr, d_th, H, d_pad, f_pad)
    W_enc = W_enc.astype(operand_dtype)   # bf16 halves the weight DMA when used

    # Pack the three modality inputs along features: (B, D) -> pad to d_pad.
    x = jnp.concatenate([ppg, hr, thermal], axis=1).astype(operand_dtype)

    # ---- Batch tiling --------------------------------------------------
    # Lane-dense (multiple-of-128) output blocks; at large B force >= 2 grid
    # steps so the "parallel" batch axis shards across both v7x TensorCores.
    tile_b = max(128, _round_up(tile_b, 128))
    B_lane = _round_up(B, 128)
    n_tiles = _ceil_div(B_lane, tile_b)
    if n_tiles == 1 and B_lane >= 1024:
        n_tiles = 2
    tile_eff = _round_up(_ceil_div(B_lane, n_tiles), 128)
    B_pad = tile_eff * n_tiles

    if (B_pad != B) or (d_pad != D):
        x = jnp.pad(x, ((0, B_pad - B), (0, d_pad - D)))

    # ---- VMEM budget & cost hint ----------------------------------------
    op_bytes = jnp.dtype(operand_dtype).itemsize
    vmem_need = (2 * tile_eff * d_pad * op_bytes        # double-buffered x tile
                 + 2 * d_pad * f_pad * op_bytes         # W_enc buffers
                 + 4 * 2 * f_pad * 4                    # biases / out weights
                 + 2 * tile_eff * 4                     # double-buffered out row
                 + tile_eff * f_pad * 4)                # feat intermediate
    vmem_limit = int(min(max(2 * vmem_need + (4 << 20), 16 << 20), 56 << 20))

    cost = pl.CostEstimate(
        flops=2 * B_pad * d_pad * f_pad + 2 * B_pad * f_pad,
        transcendentals=0,
        bytes_accessed=(B_pad * d_pad * op_bytes
                        + d_pad * f_pad * op_bytes
                        + 2 * f_pad * 4
                        + B_pad * 4),
    )

    out = pl.pallas_call(
        _late_fusion_kernel,
        out_shape=jax.ShapeDtypeStruct((1, B_pad), jnp.float32),
        grid=(n_tiles,),
        in_specs=[
            pl.BlockSpec((tile_eff, d_pad), lambda i: (i, 0)),   # streamed input
            pl.BlockSpec((d_pad, f_pad), lambda i: (0, 0)),      # fused enc W (pinned)
            pl.BlockSpec((1, f_pad), lambda i: (0, 0)),          # fused enc b (pinned)
            pl.BlockSpec((1, f_pad), lambda i: (0, 0)),          # folded out W (pinned)
        ],
        out_specs=pl.BlockSpec((1, tile_eff), lambda i: (0, i)),  # lane-dense row
        compiler_params=pltpu.CompilerParams(
            dimension_semantics=("parallel",),
            vmem_limit_bytes=vmem_limit,
        ),
        cost_estimate=cost,
    )(x, W_enc, b_enc, w_out)

    return out.reshape(-1)[:B].reshape(B, 1)


# ---------------------------------------------------------------------------
# Pure-JAX reference (mirrors the PyTorch module exactly).
# ---------------------------------------------------------------------------
def _reference(ppg, thermal, hr, p):
    def enc(x, w, b):
        return jnp.maximum(x @ w + b, 0.0)
    ppg_pred = enc(ppg, p["wpe"], p["bpe"]) @ p["wpr"] + p["bpr"][0]
    hr_pred = enc(hr, p["whe"], p["bhe"]) @ p["whr"] + p["bhr"][0]
    th_pred = enc(thermal, p["wte"], p["bte"]) @ p["wtr"] + p["btr"][0]
    preds = jnp.concatenate([ppg_pred, hr_pred, th_pred], axis=1)  # (B, 3)
    return preds @ p["wf"][:, None] + p["bf"][0]


def make_params(key, d_ppg, d_hr, d_th, hidden):
    ks = jax.random.split(key, 16)

    def lin(k, fan_in, fan_out):
        s = 1.0 / jnp.sqrt(jnp.float32(fan_in))
        return jax.random.normal(k, (fan_in, fan_out), jnp.float32) * s

    return {
        "wpe": lin(ks[0], d_ppg, hidden),
        "bpe": jax.random.normal(ks[1], (1, hidden), jnp.float32) * 0.01,
        "whe": lin(ks[2], d_hr, hidden),
        "bhe": jax.random.normal(ks[3], (1, hidden), jnp.float32) * 0.01,
        "wte": lin(ks[4], d_th, hidden),
        "bte": jax.random.normal(ks[5], (1, hidden), jnp.float32) * 0.01,
        "wpr": lin(ks[6], hidden, 1),
        "bpr": jax.random.normal(ks[7], (1,), jnp.float32) * 0.01,
        "whr": lin(ks[8], hidden, 1),
        "bhr": jax.random.normal(ks[9], (1,), jnp.float32) * 0.01,
        "wtr": lin(ks[10], hidden, 1),
        "btr": jax.random.normal(ks[11], (1,), jnp.float32) * 0.01,
        "wf": jax.random.normal(ks[12], (3,), jnp.float32) * (1.0 / jnp.sqrt(3.0)),
        "bf": jax.random.normal(ks[13], (1,), jnp.float32) * 0.01,
    }


if __name__ == "__main__":
    B, D_PPG, D_HR, D_TH, HIDDEN = 2, 64, 16, 32, 32

    key = jax.random.PRNGKey(0)
    k_ppg, k_hr, k_th, k_params, k_big = jax.random.split(key, 5)

    ppg_data = jax.random.normal(k_ppg, (B, D_PPG), jnp.float32)
    hr_data = jax.random.normal(k_hr, (B, D_HR), jnp.float32)
    thermal_data = jax.random.normal(k_th, (B, D_TH), jnp.float32)
    params = make_params(k_params, D_PPG, D_HR, D_TH, HIDDEN)

    # --- LOSO-style tiny batch (f32 operands, exact path) -----------------
    out = late_fusion_forward(ppg_data, thermal_data, hr_data, params)
    out = jax.block_until_ready(out)
    ref = _reference(ppg_data, thermal_data, hr_data, params)
    assert out.shape == (B, 1)
    assert jnp.allclose(out, ref, atol=1e-4, rtol=1e-4)

    # --- Large batch: multi-tile grid + bf16 operand streaming ------------
    B2 = 2048
    kp2, kh2, kt2 = jax.random.split(k_big, 3)
    ppg2 = jax.random.normal(kp2, (B2, D_PPG), jnp.float32)
    hr2 = jax.random.normal(kh2, (B2, D_HR), jnp.float32)
    th2 = jax.random.normal(kt2, (B2, D_TH), jnp.float32)
    out2 = late_fusion_forward(ppg2, th2, hr2, params,
                               tile_b=1024, operand_dtype=jnp.bfloat16)
    out2 = jax.block_until_ready(out2)
    ref2 = _reference(ppg2, th2, hr2, params)
    assert out2.shape == (B2, 1)
    assert jnp.allclose(out2, ref2, atol=5e-2, rtol=5e-2)  # bf16 operands

    print("KERNEL_OK")
</pallas_src>

<mosaic_0001>
module attributes {stable_mosaic.version = 11 : i64} {
  func.func @_late_fusion_kernel(%arg0: i32, %arg1: memref<128x128xf32, #tpu.memory_space<vmem>>, %arg2: memref<128x128xf32, #tpu.memory_space<vmem>>, %arg3: memref<1x128xf32, #tpu.memory_space<vmem>>, %arg4: memref<1x128xf32, #tpu.memory_space<vmem>>, %arg5: memref<1x128xf32, #tpu.memory_space<vmem>>) attributes {dimension_semantics = [#tpu.dimension_semantics<parallel>], iteration_bounds = array<i64: 1>, scalar_prefetch = 0 : i64, scratch_operands = 0 : i64, tpu.core_type = #tpu.core_type<tc>, window_params = [{transform_indices = @transform_0, window_bounds = array<i64: 128, 128>}, {pipeline_mode = #tpu.pipeline_mode<synchronous>, transform_indices = @transform_1, window_bounds = array<i64: 128, 128>}, {pipeline_mode = #tpu.pipeline_mode<synchronous>, transform_indices = @transform_2, window_bounds = array<i64: 1, 128>}, {pipeline_mode = #tpu.pipeline_mode<synchronous>, transform_indices = @transform_3, window_bounds = array<i64: 1, 128>}, {transform_indices = @transform_4, window_bounds = array<i64: 1, 128>}]} {
    %c0 = arith.constant 0 : index
    %c0_0 = arith.constant 0 : index
    %0 = vector.load %arg1[%c0, %c0_0] : memref<128x128xf32, #tpu.memory_space<vmem>>, vector<128x128xf32>
    %c0_1 = arith.constant 0 : index
    %c0_2 = arith.constant 0 : index
    %1 = vector.load %arg2[%c0_1, %c0_2] : memref<128x128xf32, #tpu.memory_space<vmem>>, vector<128x128xf32>
    %cst = arith.constant dense<0.000000e+00> : vector<128x128xf32>
    %2 = tpu.matmul %0, %1, %cst {dimension_numbers = #tpu.dot_dimension_numbers<[1], [0], [0], [1], [0, 0, 1, 1], [], []>} : vector<128x128xf32>, vector<128x128xf32>, vector<128x128xf32> -> vector<128x128xf32>
    %c0_3 = arith.constant 0 : index
    %c0_4 = arith.constant 0 : index
    %3 = vector.load %arg3[%c0_3, %c0_4] : memref<1x128xf32, #tpu.memory_space<vmem>>, vector<1x128xf32>
    %4 = vector.broadcast %3 : vector<1x128xf32> to vector<128x128xf32>
    %5 = arith.addf %2, %4 : vector<128x128xf32>
    %cst_5 = arith.constant 0.000000e+00 : f32
    %6 = vector.broadcast %cst_5 : f32 to vector<128x128xf32>
    %7 = arith.maximumf %5, %6 : vector<128x128xf32>
    %c0_6 = arith.constant 0 : index
    %c0_7 = arith.constant 0 : index
    %8 = vector.load %arg4[%c0_6, %c0_7] : memref<1x128xf32, #tpu.memory_space<vmem>>, vector<1x128xf32>
    %cst_8 = arith.constant dense<0.000000e+00> : vector<1x128xf32>
    %9 = tpu.matmul %8, %7, %cst_8 {dimension_numbers = #tpu.dot_dimension_numbers<[1], [1], [0], [0], [0, 0, 1, 0], [], []>} : vector<1x128xf32>, vector<128x128xf32>, vector<1x128xf32> -> vector<1x128xf32>
    %c0_9 = arith.constant 0 : index
    %c0_10 = arith.constant 0 : index
    %10 = vector.load %arg5[%c0_9, %c0_10] : memref<1x128xf32, #tpu.memory_space<vmem>>, vector<1x128xf32>
    tpu.vector_store %arg5[%c0_9, %c0_10], %9 {strides = array<i32>} : memref<1x128xf32, #tpu.memory_space<vmem>>, vector<1x128xf32>,
    return
  }
  func.func @transform_0(%arg0: i32) -> (i32, i32) {
    %c0_i32 = arith.constant 0 : i32
    %c0_i32_0 = arith.constant 0 : i32
    return %arg0, %c0_i32 : i32, i32
  }
  func.func @transform_1(%arg0: i32) -> (i32, i32) {
    %c0_i32 = arith.constant 0 : i32
    %c0_i32_0 = arith.constant 0 : i32
    %c0_i32_1 = arith.constant 0 : i32
    return %c0_i32, %c0_i32_0 : i32, i32
  }
  func.func @transform_2(%arg0: i32) -> (i32, i32) {
    %c0_i32 = arith.constant 0 : i32
    %c0_i32_0 = arith.constant 0 : i32
    %c0_i32_1 = arith.constant 0 : i32
    return %c0_i32, %c0_i32_0 : i32, i32
  }
  func.func @transform_3(%arg0: i32) -> (i32, i32) {
    %c0_i32 = arith.constant 0 : i32
    %c0_i32_0 = arith.constant 0 : i32
    %c0_i32_1 = arith.constant 0 : i32
    return %c0_i32, %c0_i32_0 : i32, i32
  }
  func.func @transform_4(%arg0: i32) -> (i32, i32) {
    %c0_i32 = arith.constant 0 : i32
    %c0_i32_0 = arith.constant 0 : i32
    return %c0_i32, %arg0 : i32, i32
  }
}

</mosaic_0001>

<llo_original>
// kernel: tpu_custom_call.1
$region0: #{tpu_custom_call.1}
  #allocation0 [shape = 'u32[]', space=smem, size = 0x4, offset = 0x4, fixed_abs, tag = 'smem constant byte address 0x4 - core index']
  #allocation1 [shape = 'u32[144,128]{1,0:T(1,128)}', space=vmem, size = 0x12000, scoped, tag = 'internal scratch']
  %s0 = inlined_call_operand.hbm [shape: f32[128,128], index: 0, kind: input, shape index: {}]
  %s1 = inlined_call_operand.hbm [shape: f32[128,128], index: 1, kind: input, shape index: {}]
  %s2 = inlined_call_operand.vmem [shape: f32[1,128], index: 2, kind: input, shape index: {}]
  %s3 = inlined_call_operand.vmem [shape: f32[1,128], index: 3, kind: input, shape index: {}]
  %s4 = inlined_call_operand.hbm [shape: f32[1,128], index: 4, kind: output, shape index: {}]
  %s5 = sld [smem:[#allocation0]]
  $region34: #{tpu_custom_call.1} parent=0
    _
  %s7 = ssub.s32 1, %s5
  %s8 = scalar_select 0, %s7, %s5
  $region1: #{tpu_custom_call.1} parent=0
    #allocation2 [shape = 'u8[65536]{0}', space=vmem, size = 0x10000, scoped, tag = 'input window, operand 0, single buffered']
    #allocation3 [shape = 's32[1]{0}', space=sflag, size = 0x4, scoped, tag = 'scoped memory for tpu_custom_call.1']
    #allocation4 [shape = 's32[1]{0}', space=sflag, size = 0x4, scoped, tag = 'scoped memory for tpu_custom_call.1']
    #allocation5 [shape = 'u8[65536]{0}', space=vmem, size = 0x10000, scoped, tag = 'input window, operand 1, single buffered']
    #allocation6 [shape = 's32[1]{0}', space=sflag, size = 0x4, scoped, tag = 'scoped memory for tpu_custom_call.1']
    #allocation7 [shape = 'u8[512]{0}', space=vmem, size = 0x400, scoped, tag = 'output window, operand 0, single buffered']
    %9 = vsyncpa [#allocation3], 0
    %10 = vsyncpa [#allocation6], 0
    %11 = vsyncpa [#allocation4], 0
    // Predicated region
    $region2: #{tpu_custom_call.1} parent=1 // pred_check
      _
    $region3: #{tpu_custom_call.1} parent=1 // pred_check_branch
      %13 = sbr.rel (0) target = $region5
    $region4: #{tpu_custom_call.1} parent=1 // pred_region
      %s15 = ssub.s32 2048, 2048
      %16 = vsyncadd [#allocation3], %s15
      %s17 = sshll.u32 [#allocation2], 4
      %s18 = int_to_ptr.vmem [resolvable:$true] %s17
      %23 = dma.hbm_to_vmem [thread:$0]  %s0, 2048, %s18, [#allocation3], 128, 128, 8
    $region5: #{tpu_custom_call.1} parent=1 // pred_fallthru
      _
    // Predicated region
    $region6: #{tpu_custom_call.1} parent=1 // pred_check
      _
    $region7: #{tpu_custom_call.1} parent=1 // pred_check_branch
      %25 = sbr.rel (0) target = $region9
    $region8: #{tpu_custom_call.1} parent=1 // pred_region
      %s27 = ssub.s32 2048, 2048
      %28 = vsyncadd [#allocation6], %s27
      %s29 = sshll.u32 [#allocation5], 4
      %s30 = int_to_ptr.vmem [resolvable:$true] %s29
      %35 = dma.hbm_to_vmem [thread:$0]  %s1, 2048, %s30, [#allocation6], 128, 128, 8
    $region9: #{tpu_custom_call.1} parent=1 // pred_fallthru
      _
    // Predicated region
    $region10: #{tpu_custom_call.1} parent=1 // pred_check
      _
    $region11: #{tpu_custom_call.1} parent=1 // pred_check_branch
      %37 = sbr.rel (0) target = $region13
    $region12: #{tpu_custom_call.1} parent=1 // pred_region
      _
    $region13: #{tpu_custom_call.1} parent=1 // pred_fallthru
      _
    // Predicated region
    $region14: #{tpu_custom_call.1} parent=1 // pred_check
      _
    $region15: #{tpu_custom_call.1} parent=1 // pred_check_branch
      %39 = sbr.rel (0) target = $region17
    $region16: #{tpu_custom_call.1} parent=1 // pred_region
      _
    $region17: #{tpu_custom_call.1} parent=1 // pred_fallthru
      _
    // Predicated region
    $region18: #{tpu_custom_call.1} parent=1 // pred_check
      _
    $region19: #{tpu_custom_call.1} parent=1 // pred_check_branch
      %41 = sbr.rel (0) target = $region21
    $region20: #{tpu_custom_call.1} parent=1 // pred_region
      %42 = dma.done [#allocation3], 2048
    $region21: #{tpu_custom_call.1} parent=1 // pred_fallthru
      _
    // Predicated region
    $region22: #{tpu_custom_call.1} parent=1 // pred_check
      _
    $region23: #{tpu_custom_call.1} parent=1 // pred_check_branch
      %44 = sbr.rel (0) target = $region25
    $region24: #{tpu_custom_call.1} parent=1 // pred_region
      %45 = dma.done [#allocation6], 2048
    $region25: #{tpu_custom_call.1} parent=1 // pred_fallthru
      _
    %v46 = vld [vmem:[#allocation2] sm:$0xff]
    %v47 = vld [vmem:[#allocation2 + $0x8] sm:$0xff]
    %v48 = vld [vmem:[#allocation2 + $0x10] sm:$0xff]
    %v49 = vld [vmem:[#allocation2 + $0x18] sm:$0xff]
    %v50 = vld [vmem:[#allocation2 + $0x20] sm:$0xff]
    %v51 = vld [vmem:[#allocation2 + $0x28] sm:$0xff]
    %v52 = vld [vmem:[#allocation2 + $0x30] sm:$0xff]
    %v53 = vld [vmem:[#allocation2 + $0x38] sm:$0xff]
    %v54 = vld [vmem:[#allocation2 + $0x40] sm:$0xff]
    %v55 = vld [vmem:[#allocation2 + $0x48] sm:$0xff]
    %v56 = vld [vmem:[#allocation2 + $0x50] sm:$0xff]
    %v57 = vld [vmem:[#allocation2 + $0x58] sm:$0xff]
    %v58 = vld [vmem:[#allocation2 + $0x60] sm:$0xff]
    %v59 = vld [vmem:[#allocation2 + $0x68] sm:$0xff]
    %v60 = vld [vmem:[#allocation2 + $0x70] sm:$0xff]
    %v61 = vld [vmem:[#allocation2 + $0x78] sm:$0xff]
    %v62 = vld [vmem:[#allocation5] sm:$0xff]
    %v63 = vld [vmem:[#allocation5 + $0x8] sm:$0xff]
    %v64 = vld [vmem:[#allocation5 + $0x10] sm:$0xff]
    %v65 = vld [vmem:[#allocation5 + $0x18] sm:$0xff]
    %v66 = vld [vmem:[#allocation5 + $0x20] sm:$0xff]
    %v67 = vld [vmem:[#allocation5 + $0x28] sm:$0xff]
    %v68 = vld [vmem:[#allocation5 + $0x30] sm:$0xff]
    %v69 = vld [vmem:[#allocation5 + $0x38] sm:$0xff]
    %v70 = vld [vmem:[#allocation5 + $0x40] sm:$0xff]
    %v71 = vld [vmem:[#allocation5 + $0x48] sm:$0xff]
    %v72 = vld [vmem:[#allocation5 + $0x50] sm:$0xff]
    %v73 = vld [vmem:[#allocation5 + $0x58] sm:$0xff]
    %v74 = vld [vmem:[#allocation5 + $0x60] sm:$0xff]
    %v75 = vld [vmem:[#allocation5 + $0x68] sm:$0xff]
    %v76 = vld [vmem:[#allocation5 + $0x70] sm:$0xff]
    %v77 = vld [vmem:[#allocation5 + $0x78] sm:$0xff]
    %v78 = vld [vmem:[%s2] sm:$0x1]
    %v80 = vlaneseq
    %v81 = vshrl.u32 %v80, 7
    %v82 = vsub.s32 0, %v81
    %v83 = vrot.slane %v78, %v82
    %85 = vmatprep.subr.mxu0 0.0
    %86 = vmatpush1.msra.mxu0 %v62
    %87 = vmatprep.subr.mxu0 0.0
    %88 = vmatpush1.msra.mxu0 %v63
    %89 = vmatprep.subr.mxu0 0.0
    %90 = vmatpush1.msra.mxu0 %v64
    %91 = vmatprep.subr.mxu0 0.0
    %92 = vmatpush1.msra.mxu0 %v65
    %93 = vmatprep.subr.mxu0 0.0
    %94 = vmatpush1.msra.mxu0 %v66
    %95 = vmatprep.subr.mxu0 0.0
    %96 = vmatpush1.msra.mxu0 %v67
    %97 = vmatprep.subr.mxu0 0.0
    %98 = vmatpush1.msra.mxu0 %v68
    %99 = vmatprep.subr.mxu0 0.0
    %100 = vmatpush1.msra.mxu0 %v69
    %101 = vmatprep.subr.mxu0 0.0
    %102 = vmatpush1.msra.mxu0 %v70
    %103 = vmatprep.subr.mxu0 0.0
    %104 = vmatpush1.msra.mxu0 %v71
    %105 = vmatprep.subr.mxu0 0.0
    %106 = vmatpush1.msra.mxu0 %v72
    %107 = vmatprep.subr.mxu0 0.0
    %108 = vmatpush1.msra.mxu0 %v73
    %109 = vmatprep.subr.mxu0 0.0
    %110 = vmatpush1.msra.mxu0 %v74
    %111 = vmatprep.subr.mxu0 0.0
    %112 = vmatpush1.msra.mxu0 %v75
    %113 = vmatprep.subr.mxu0 0.0
    %114 = vmatpush1.msra.mxu0 %v76
    %115 = vmatprep.subr.mxu0 0.0
    %116 = vmatpush1.msra.mxu0 %v77
    %117 = vmatprep.subr.mxu0 0.0
    %118 = vmatpush1.msra.mxu0 0.0
    %119 = vmatprep.subr.mxu0 0.0
    %120 = vmatpush1.msra.mxu0 0.0
    %121 = vmatprep.subr.mxu0 0.0
    %122 = vmatpush1.msra.mxu0 0.0
    %123 = vmatprep.subr.mxu0 0.0
    %124 = vmatpush1.msra.mxu0 0.0
    %125 = vmatprep.subr.mxu0 0.0
    %126 = vmatpush1.msra.mxu0 0.0
    %127 = vmatprep.subr.mxu0 0.0
    %128 = vmatpush1.msra.mxu0 0.0
    %129 = vmatprep.subr.mxu0 0.0
    %130 = vmatpush1.msra.mxu0 0.0
    %131 = vmatprep.subr.mxu0 0.0
    %132 = vmatpush1.msra.mxu0 0.0
    %133 = vmatprep.subr.mxu0 0.0
    %134 = vmatpush1.msra.mxu0 0.0
    %135 = vmatprep.subr.mxu0 0.0
    %136 = vmatpush1.msra.mxu0 0.0
    %137 = vmatprep.subr.mxu0 0.0
    %138 = vmatpush1.msra.mxu0 0.0
    %139 = vmatprep.subr.mxu0 0.0
    %140 = vmatpush1.msra.mxu0 0.0
    %141 = vmatprep.subr.mxu0 0.0
    %142 = vmatpush1.msra.mxu0 0.0
    %143 = vmatprep.subr.mxu0 0.0
    %144 = vmatpush1.msra.mxu0 0.0
    %145 = vmatprep.subr.mxu0 0.0
    %146 = vmatpush1.msra.mxu0 0.0
    %147 = vmatprep.subr.mxu0 0.0
    %148 = vmatpush1.msra.mxu0 0.0
    %149 = vmatprep.mubr.f32.mxu0 0.0
    %150 = vmatmul.mubr.f32.gmra.mrb[0].mxu0 %v46
    %v151 = vpop.f32.mrb[0].mxu0
    %v152 = vadd.f32 %v83, %v151
    %v153 = vpop.f32.mrb[0].mxu0
    %154 = vmatprep.mubr.f32.mxu0 0.0
    %155 = vmatmul.mubr.f32.gmra.mrb[0].mxu0 %v47
    %v156 = vpop.f32.mrb[0].mxu0
    %v157 = vadd.f32 %v83, %v156
    %v158 = vpop.f32.mrb[0].mxu0
    %159 = vmatprep.mubr.f32.mxu0 0.0
    %160 = vmatmul.mubr.f32.gmra.mrb[0].mxu0 %v48
    %v161 = vpop.f32.mrb[0].mxu0
    %v162 = vadd.f32 %v83, %v161
    %v163 = vpop.f32.mrb[0].mxu0
    %164 = vmatprep.mubr.f32.mxu0 0.0
    %165 = vmatmul.mubr.f32.gmra.mrb[0].mxu0 %v49
    %v166 = vpop.f32.mrb[0].mxu0
    %v167 = vadd.f32 %v83, %v166
    %v168 = vpop.f32.mrb[0].mxu0
    %169 = vmatprep.mubr.f32.mxu0 0.0
    %170 = vmatmul.mubr.f32.gmra.mrb[0].mxu0 %v50
    %v171 = vpop.f32.mrb[0].mxu0
    %v172 = vadd.f32 %v83, %v171
    %v173 = vpop.f32.mrb[0].mxu0
    %174 = vmatprep.mubr.f32.mxu0 0.0
    %175 = vmatmul.mubr.f32.gmra.mrb[0].mxu0 %v51
    %v176 = vpop.f32.mrb[0].mxu0
    %v177 = vadd.f32 %v83, %v176
    %v178 = vpop.f32.mrb[0].mxu0
    %179 = vmatprep.mubr.f32.mxu0 0.0
    %180 = vmatmul.mubr.f32.gmra.mrb[0].mxu0 %v52
    %v181 = vpop.f32.mrb[0].mxu0
    %v182 = vadd.f32 %v83, %v181
    %v183 = vpop.f32.mrb[0].mxu0
    %184 = vmatprep.mubr.f32.mxu0 0.0
    %185 = vmatmul.mubr.f32.gmra.mrb[0].mxu0 %v53
    %v186 = vpop.f32.mrb[0].mxu0
    %v187 = vadd.f32 %v83, %v186
    %v188 = vpop.f32.mrb[0].mxu0
    %189 = vmatprep.mubr.f32.mxu0 0.0
    %190 = vmatmul.mubr.f32.gmra.mrb[0].mxu0 %v54
    %v191 = vpop.f32.mrb[0].mxu0
    %v192 = vadd.f32 %v83, %v191
    %v193 = vpop.f32.mrb[0].mxu0
    %194 = vmatprep.mubr.f32.mxu0 0.0
    %195 = vmatmul.mubr.f32.gmra.mrb[0].mxu0 %v55
    %v196 = vpop.f32.mrb[0].mxu0
    %v197 = vadd.f32 %v83, %v196
    %v198 = vpop.f32.mrb[0].mxu0
    %199 = vmatprep.mubr.f32.mxu0 0.0
    %200 = vmatmul.mubr.f32.gmra.mrb[0].mxu0 %v56
    %v201 = vpop.f32.mrb[0].mxu0
    %v202 = vadd.f32 %v83, %v201
    %v203 = vpop.f32.mrb[0].mxu0
    %204 = vmatprep.mubr.f32.mxu0 0.0
    %205 = vmatmul.mubr.f32.gmra.mrb[0].mxu0 %v57
    %v206 = vpop.f32.mrb[0].mxu0
    %v207 = vadd.f32 %v83, %v206
    %v208 = vpop.f32.mrb[0].mxu0
    %209 = vmatprep.mubr.f32.mxu0 0.0
    %210 = vmatmul.mubr.f32.gmra.mrb[0].mxu0 %v58
    %v211 = vpop.f32.mrb[0].mxu0
    %v212 = vadd.f32 %v83, %v211
    %v213 = vpop.f32.mrb[0].mxu0
    %214 = vmatprep.mubr.f32.mxu0 0.0
    %215 = vmatmul.mubr.f32.gmra.mrb[0].mxu0 %v59
    %v216 = vpop.f32.mrb[0].mxu0
    %v217 = vadd.f32 %v83, %v216
    %v218 = vpop.f32.mrb[0].mxu0
    %219 = vmatprep.mubr.f32.mxu0 0.0
    %220 = vmatmul.mubr.f32.gmra.mrb[0].mxu0 %v60
    %v221 = vpop.f32.mrb[0].mxu0
    %v222 = vadd.f32 %v83, %v221
    %v223 = vpop.f32.mrb[0].mxu0
    %224 = vmatprep.mubr.f32.mxu0 0.0
    %225 = vmatmul.mubr.f32.gmra.mrb[0].mxu0 %v61
    %v226 = vpop.f32.mrb[0].mxu0
    %v227 = vadd.f32 %v83, %v226
    %v228 = vpop.f32.mrb[0].mxu0
    %229 = vdwg.mxu0
    %v230 = vmax.f32 %v152, 0.0
    %v231 = vmax.f32 %v157, 0.0
    %v232 = vmax.f32 %v162, 0.0
    %v233 = vmax.f32 %v167, 0.0
    %v234 = vmax.f32 %v172, 0.0
    %v235 = vmax.f32 %v177, 0.0
    %v236 = vmax.f32 %v182, 0.0
    %v237 = vmax.f32 %v187, 0.0
    %v238 = vmax.f32 %v192, 0.0
    %v239 = vmax.f32 %v197, 0.0
    %v240 = vmax.f32 %v202, 0.0
    %v241 = vmax.f32 %v207, 0.0
    %v242 = vmax.f32 %v212, 0.0
    %v243 = vmax.f32 %v217, 0.0
    %v244 = vmax.f32 %v222, 0.0
    %v245 = vmax.f32 %v227, 0.0
    %v246 = vld [vmem:[%s3] sm:$0x1]
    %247 = vmatprep.subr.mxu0 0.0
    %248 = vmatpush1.xpose.msra.mxu0 %v230
    %249 = vmatprep.subr.mxu0 0.0
    %250 = vmatpush1.xpose.msra.mxu0 %v231
    %251 = vmatprep.subr.mxu0 0.0
    %252 = vmatpush1.xpose.msra.mxu0 %v232
    %253 = vmatprep.subr.mxu0 0.0
    %254 = vmatpush1.xpose.msra.mxu0 %v233
    %255 = vmatprep.subr.mxu0 0.0
    %256 = vmatpush1.xpose.msra.mxu0 %v234
    %257 = vmatprep.subr.mxu0 0.0
    %258 = vmatpush1.xpose.msra.mxu0 %v235
    %259 = vmatprep.subr.mxu0 0.0
    %260 = vmatpush1.xpose.msra.mxu0 %v236
    %261 = vmatprep.subr.mxu0 0.0
    %262 = vmatpush1.xpose.msra.mxu0 %v237
    %263 = vmatprep.subr.mxu0 0.0
    %264 = vmatpush1.xpose.msra.mxu0 %v238
    %265 = vmatprep.subr.mxu0 0.0
    %266 = vmatpush1.xpose.msra.mxu0 %v239
    %267 = vmatprep.subr.mxu0 0.0
    %268 = vmatpush1.xpose.msra.mxu0 %v240
    %269 = vmatprep.subr.mxu0 0.0
    %270 = vmatpush1.xpose.msra.mxu0 %v241
    %271 = vmatprep.subr.mxu0 0.0
    %272 = vmatpush1.xpose.msra.mxu0 %v242
    %273 = vmatprep.subr.mxu0 0.0
    %274 = vmatpush1.xpose.msra.mxu0 %v243
    %275 = vmatprep.subr.mxu0 0.0
    %276 = vmatpush1.xpose.msra.mxu0 %v244
    %277 = vmatprep.subr.mxu0 0.0
    %278 = vmatpush1.xpose.msra.mxu0 %v245
    %279 = vmatprep.subr.mxu0 0.0
    %280 = vmatpush1.xpose.msra.mxu0 0.0
    %281 = vmatprep.subr.mxu0 0.0
    %282 = vmatpush1.xpose.msra.mxu0 0.0
    %283 = vmatprep.subr.mxu0 0.0
    %284 = vmatpush1.xpose.msra.mxu0 0.0
    %285 = vmatprep.subr.mxu0 0.0
    %286 = vmatpush1.xpose.msra.mxu0 0.0
    %287 = vmatprep.subr.mxu0 0.0
    %288 = vmatpush1.xpose.msra.mxu0 0.0
    %289 = vmatprep.subr.mxu0 0.0
    %290 = vmatpush1.xpose.msra.mxu0 0.0
    %291 = vmatprep.subr.mxu0 0.0
    %292 = vmatpush1.xpose.msra.mxu0 0.0
    %293 = vmatprep.subr.mxu0 0.0
    %294 = vmatpush1.xpose.msra.mxu0 0.0
    %295 = vmatprep.subr.mxu0 0.0
    %296 = vmatpush1.xpose.msra.mxu0 0.0
    %297 = vmatprep.subr.mxu0 0.0
    %298 = vmatpush1.xpose.msra.mxu0 0.0
    %299 = vmatprep.subr.mxu0 0.0
    %300 = vmatpush1.xpose.msra.mxu0 0.0
    %301 = vmatprep.subr.mxu0 0.0
    %302 = vmatpush1.xpose.msra.mxu0 0.0
    %303 = vmatprep.subr.mxu0 0.0
    %304 = vmatpush1.xpose.msra.mxu0 0.0
    %305 = vmatprep.subr.mxu0 0.0
    %306 = vmatpush1.xpose.msra.mxu0 0.0
    %307 = vmatprep.subr.mxu0 0.0
    %308 = vmatpush1.xpose.msra.mxu0 0.0
    %309 = vmatprep.subr.mxu0 0.0
    %310 = vmatpush1.xpose.msra.mxu0 0.0
    %311 = vmatprep.mubr.f32.mxu0 0.0
    %312 = vmatmul.mubr.f32.gmra.mrb[0].mxu0 %v246
    %v313 = vpop.f32.mrb[0].mxu0
    %v314 = vadd.f32 0.0, %v313
    %v315 = vpop.f32.mrb[0].mxu0
    %316 = vdwg.mxu0
    %317 = vst [vmem:[#allocation7] sm:$0x1] %v314
    // Predicated region
    $region26: #{tpu_custom_call.1} parent=1 // pred_check
      _
    $region27: #{tpu_custom_call.1} parent=1 // pred_check_branch
      %319 = sbr.rel (0) target = $region29
    $region28: #{tpu_custom_call.1} parent=1 // pred_region
      %s321 = ssub.s32 16, 16
      %322 = vsyncadd [#allocation4], %s321
      %s324 = sshll.u32 [#allocation7], 4
      %s325 = int_to_ptr.vmem [resolvable:$true] %s324
      %327 = dma.vmem_to_hbm [thread:$0]  %s325, 16, %s4, [#allocation4]
    $region29: #{tpu_custom_call.1} parent=1 // pred_fallthru
      _
    // Predicated region
    $region30: #{tpu_custom_call.1} parent=1 // pred_check
      _
    $region31: #{tpu_custom_call.1} parent=1 // pred_check_branch
      %329 = sbr.rel (0) target = $region33
    $region32: #{tpu_custom_call.1} parent=1 // pred_region
      %330 = dma.done [#allocation4], 16
    $region33: #{tpu_custom_call.1} parent=1 // pred_fallthru
      _
    %331 = vsyncpa [#allocation3], 1
    %332 = vsyncpa [#allocation6], 1
    %333 = vsyncpa [#allocation4], 1

</llo_original>
